<compile_context>
chip_gen: v7x
topology: tpu7x:2x2x1
jax: 0.10.0
libtpu: 0.0.40
codegen_flags: <defaults>
</compile_context>

<pallas_src>
import jax
import jax.numpy as jnp
from jax import lax
from jax.experimental import pallas as pl
from jax.experimental.pallas import tpu as pltpu


def _pick_tile(s, target=512):
    """Largest spatial tile <= target dividing s (multiple of 16, then 8, for sublane packing)."""
    if s <= target:
        return s
    for step in (16, 8):
        for d in range(min(target, s), step - 1, -1):
            if s % d == 0 and d % step == 0:
                return d
    # TODO(synk): spatial extents with no divisor that is a multiple of 8 fall back to the
    # full extent; a masked pl.cdiv tail would bound the block size for huge frames.
    return s


def _vmem_limit(*block_bytes):
    """Scoped-VMEM budget from the double-buffered block footprint, clamped to physical VMEM."""
    need = 2 * int(sum(block_bytes))                 # double-buffered working set
    try:
        cap = int(pltpu.get_tpu_info().vmem_capacity_bytes)
    except Exception:
        cap = 64 * 1024 * 1024                       # v7x floor
    ceiling = (cap * 3) // 4                         # leave compiler / pipeline headroom
    return int(min(ceiling, max(32 * 1024 * 1024, 2 * need)))


def _spatial_conv_stats_kernel(p_ref, w_ref, b_ref, he_ref, ho_ref, mean_ref, m2_ref):
    # p_ref:    (1, 1, 2, ts, 9*Cin) bf16 im2col patches for one (batch, frame-pair, tile)
    # w_ref:    (9*Cin, C) bf16 conv weights, b_ref: (1, C) f32 bias
    # he_ref:   (1, 1, ts, C) bf16 conv output of the even frame (center tap)
    # ho_ref:   (1, 1, ts, C) bf16 conv output of the odd frame (plus / minus tap)
    # mean_ref: (1, 1, 1, 1, C) per-tile channel mean; m2_ref: centered sum of squares
    ts = p_ref.shape[3]
    k = p_ref.shape[4]
    p = p_ref[0, 0].reshape(2 * ts, k)                      # pair batched -> bigger MXU M
    h = jnp.dot(p, w_ref[...], preferred_element_type=jnp.float32) + b_ref[...]
    he_ref[0, 0] = h[:ts].astype(he_ref.dtype)
    ho_ref[0, 0] = h[ts:].astype(ho_ref.dtype)
    n_rows = 2 * ts
    mu = jnp.sum(h, axis=0, keepdims=True) * (1.0 / n_rows)
    d = h - mu
    mean_ref[0, 0, 0] = mu
    m2_ref[0, 0, 0] = jnp.sum(d * d, axis=0, keepdims=True)


def _gn_silu_tconv_kernel(he_ref, ho_ref, hop_ref, mean_ref, rstd_ref, g_ref, b_ref,
                          w_ref, cb_ref, o_ref):
    # he/ho/hop: (1, 1, ts, C) bf16 spatial-conv output: even frame 2t, odd frame 2t+1,
    #            and the previous pair's odd frame 2t-1 (minus tap; garbage-but-masked at t==0)
    # mean/rstd: (1, 1, C) f32 per-batch GroupNorm stats broadcast to channels
    # g/b:       (1, C) GroupNorm affine;  w_ref: (3, C, C) bf16 temporal taps;  cb_ref: (1, C) bias
    # o_ref:     (1, 1, ts, C) f32 output frame t
    scale = rstd_ref[0] * g_ref[...]                        # (1, C)
    shift = b_ref[...] - mean_ref[0] * scale                # (1, C)

    def gn_silu(xb):                                        # (ts, C) bf16 -> bf16
        xn = xb.astype(jnp.float32) * scale + shift
        return (xn * jax.nn.sigmoid(xn)).astype(jnp.bfloat16)

    y_even = gn_silu(he_ref[0, 0])                          # center tap  w[1]
    y_odd = gn_silu(ho_ref[0, 0])                           # plus tap    w[2]
    y_prev = gn_silu(hop_ref[0, 0])                         # minus tap   w[0]

    acc = (jnp.dot(y_even, w_ref[1], preferred_element_type=jnp.float32)
           + jnp.dot(y_odd, w_ref[2], preferred_element_type=jnp.float32)
           + cb_ref[...])
    # frame 0's minus tap is the temporal zero pad -> mask with a scalar gate (single store,
    # no output read-modify-write).
    gate = (pl.program_id(1) > 0).astype(jnp.float32)
    acc = acc + gate * jnp.dot(y_prev, w_ref[0], preferred_element_type=jnp.float32)
    o_ref[0, 0] = acc.astype(o_ref.dtype)


def downsample3d_forward(hidden_states, params, num_frames=16, temporal_skip=False, *,
                         padding=1, num_groups=32, eps=1e-5):
    """Downsample3D forward. hidden_states: (B*num_frames, Cin, H, W) f32 NCHW.

    Returns (out, new_num_frames) exactly like the PyTorch module."""
    bt, cin, h_in, w_in = hidden_states.shape
    t = num_frames
    assert bt % t == 0
    b = bt // t
    w2d, b2d = params["conv2d_w"], params["conv2d_b"]
    gamma, beta = params["gn_gamma"], params["gn_beta"]
    w3d, b3d = params["conv3d_w"], params["conv3d_b"]
    cout = w2d.shape[0]
    assert cin == w2d.shape[1], "channel mismatch"
    assert cout % num_groups == 0
    assert t % 2 == 0, "temporal stride-2 path assumes an even frame count"
    hp = (h_in + 2 * padding - 3) // 2 + 1
    wp = (w_in + 2 * padding - 3) // 2 + 1
    s = hp * wp
    to = t // 2
    f32 = jnp.float32
    bf16 = jnp.bfloat16

    # ---- NCHW -> channels-last (bf16) + zero pad + 3x3/stride-2 im2col patches ----
    # TODO(synk): the strided patch gather and NCHW<->channels-last permutes stay in XLA;
    # eliminating the 9x im2col materialization needs manual halo DMA (overlapping windows
    # are not expressible with Blocked BlockSpecs).
    x_cl = jnp.transpose(hidden_states, (0, 2, 3, 1)).astype(bf16)
    x_pad = jnp.pad(x_cl, ((0, 0), (padding, padding), (padding, padding), (0, 0)))
    taps = []
    for di in range(3):
        for dj in range(3):
            taps.append(x_pad[:, di:di + 2 * hp - 1:2, dj:dj + 2 * wp - 1:2, :])
    patches = jnp.concatenate(taps, axis=-1).reshape(b, to, 2, s, 9 * cin)

    w9 = jnp.transpose(w2d, (2, 3, 1, 0)).reshape(9 * cin, cout).astype(bf16)
    b9 = b2d.reshape(1, cout).astype(f32)

    ts = _pick_tile(s)
    n_s = s // ts

    # ---- kernel 1: spatial conv matmul (one frame pair/step) + GroupNorm partial stats ----
    h_even, h_odd, tile_mean, tile_m2 = pl.pallas_call(
        _spatial_conv_stats_kernel,
        out_shape=(
            jax.ShapeDtypeStruct((b, to, s, cout), bf16),
            jax.ShapeDtypeStruct((b, to, s, cout), bf16),
            jax.ShapeDtypeStruct((b, to, n_s, 1, cout), f32),
            jax.ShapeDtypeStruct((b, to, n_s, 1, cout), f32),
        ),
        grid=(b, to, n_s),
        in_specs=[
            pl.BlockSpec((1, 1, 2, ts, 9 * cin), lambda bi, ti, si: (bi, ti, 0, si, 0)),
            pl.BlockSpec((9 * cin, cout), lambda bi, ti, si: (0, 0)),
            pl.BlockSpec((1, cout), lambda bi, ti, si: (0, 0)),
        ],
        out_specs=(
            pl.BlockSpec((1, 1, ts, cout), lambda bi, ti, si: (bi, ti, si, 0)),
            pl.BlockSpec((1, 1, ts, cout), lambda bi, ti, si: (bi, ti, si, 0)),
            pl.BlockSpec((1, 1, 1, 1, cout), lambda bi, ti, si: (bi, ti, si, 0, 0)),
            pl.BlockSpec((1, 1, 1, 1, cout), lambda bi, ti, si: (bi, ti, si, 0, 0)),
        ),
        compiler_params=pltpu.CompilerParams(
            dimension_semantics=("parallel", "parallel", "parallel"),
            vmem_limit_bytes=_vmem_limit(2 * ts * 9 * cin * 2, 9 * cin * cout * 2,
                                         2 * ts * cout * 2, 2 * cout * 4)),
    )(patches, w9, b9)

    if temporal_skip:
        h_full = jnp.stack([h_even, h_odd], axis=2).reshape(bt, hp, wp, cout).astype(f32)
        return jnp.transpose(h_full, (0, 3, 1, 2)), num_frames

    # ---- stable parallel merge of per-tile stats -> per-(batch, group) mean / rstd ----
    cg = cout // num_groups
    k_tiles = to * n_s
    rows_per_tile = 2 * ts
    tm = tile_mean.reshape(b, k_tiles, num_groups, cg)
    m2 = tile_m2.reshape(b, k_tiles, num_groups, cg)
    mean_g = jnp.mean(tm, axis=(1, 3))                                   # (B, G)
    dev = tm - mean_g[:, None, :, None]
    m2_g = jnp.sum(m2, axis=(1, 3)) + rows_per_tile * jnp.sum(dev * dev, axis=(1, 3))
    var_g = m2_g / (k_tiles * cg * rows_per_tile)
    rstd_g = lax.rsqrt(var_g + eps)
    mean_bc = jnp.repeat(mean_g, cg, axis=1).reshape(b, 1, cout)
    rstd_bc = jnp.repeat(rstd_g, cg, axis=1).reshape(b, 1, cout)

    gamma2 = gamma.reshape(1, cout).astype(f32)
    beta2 = beta.reshape(1, cout).astype(f32)
    w_stack = jnp.transpose(w3d.reshape(cout, cout, 3), (2, 1, 0)).astype(bf16)  # (3, Cin, Cout)
    b3 = b3d.reshape(1, cout).astype(f32)

    # ---- kernel 2: GroupNorm + SiLU + stride-2 temporal conv, one output frame per step ----
    out = pl.pallas_call(
        _gn_silu_tconv_kernel,
        out_shape=jax.ShapeDtypeStruct((b, to, s, cout), f32),
        grid=(b, to, n_s),
        in_specs=[
            pl.BlockSpec((1, 1, ts, cout), lambda bi, ti, si: (bi, ti, si, 0)),          # even 2t
            pl.BlockSpec((1, 1, ts, cout), lambda bi, ti, si: (bi, ti, si, 0)),          # odd 2t+1
            pl.BlockSpec((1, 1, ts, cout),
                         lambda bi, ti, si: (bi, jnp.maximum(ti - 1, 0), si, 0)),        # odd 2t-1
            pl.BlockSpec((1, 1, cout), lambda bi, ti, si: (bi, 0, 0)),
            pl.BlockSpec((1, 1, cout), lambda bi, ti, si: (bi, 0, 0)),
            pl.BlockSpec((1, cout), lambda bi, ti, si: (0, 0)),
            pl.BlockSpec((1, cout), lambda bi, ti, si: (0, 0)),
            pl.BlockSpec((3, cout, cout), lambda bi, ti, si: (0, 0, 0)),
            pl.BlockSpec((1, cout), lambda bi, ti, si: (0, 0)),
        ],
        out_specs=pl.BlockSpec((1, 1, ts, cout), lambda bi, ti, si: (bi, ti, si, 0)),
        compiler_params=pltpu.CompilerParams(
            dimension_semantics=("parallel", "parallel", "parallel"),
            vmem_limit_bytes=_vmem_limit(3 * ts * cout * 2, ts * cout * 4,
                                         3 * cout * cout * 2)),
    )(h_even, h_odd, h_odd, mean_bc, rstd_bc, gamma2, beta2, w_stack, b3)

    # (B, T//2, Hp*Wp, C) -> (B*(T//2), C, Hp, Wp)
    out = jnp.transpose(out.reshape(b * to, hp, wp, cout), (0, 3, 1, 2))
    return out, num_frames // 2


def _reference_forward(hidden_states, params, num_frames=16, temporal_skip=False, *,
                       padding=1, num_groups=32, eps=1e-5):
    """Plain-JAX reference mirroring the PyTorch forward exactly (f32)."""
    bt, cin, h_in, w_in = hidden_states.shape
    t = num_frames
    b = bt // t
    w2d, b2d = params["conv2d_w"], params["conv2d_b"]
    gamma, beta = params["gn_gamma"], params["gn_beta"]
    w3d, b3d = params["conv3d_w"], params["conv3d_b"]
    cout = w2d.shape[0]

    h = lax.conv_general_dilated(
        hidden_states, w2d, window_strides=(2, 2),
        padding=((padding, padding), (padding, padding)),
        dimension_numbers=("NCHW", "OIHW", "NCHW"),
        precision=lax.Precision.HIGHEST) + b2d[None, :, None, None]
    if temporal_skip:
        return h, num_frames
    hp, wp = h.shape[2], h.shape[3]
    h5 = h.reshape(b, t, cout, hp, wp).transpose(0, 2, 1, 3, 4)          # (B, C, T, Hp, Wp)
    cg = cout // num_groups
    xr = h5.reshape(b, num_groups, cg, t, hp, wp)
    mean = xr.mean(axis=(2, 3, 4, 5), keepdims=True)
    var = ((xr - mean) ** 2).mean(axis=(2, 3, 4, 5), keepdims=True)
    xn = ((xr - mean) / jnp.sqrt(var + eps)).reshape(b, cout, t, hp, wp)
    xn = xn * gamma[None, :, None, None, None] + beta[None, :, None, None, None]
    y = xn * jax.nn.sigmoid(xn)
    out = lax.conv_general_dilated(
        y, w3d, window_strides=(2, 1, 1),
        padding=((1, 1), (0, 0), (0, 0)),
        dimension_numbers=("NCDHW", "OIDHW", "NCDHW"),
        precision=lax.Precision.HIGHEST) + b3d[None, :, None, None, None]
    to = out.shape[2]
    out = out.transpose(0, 2, 1, 3, 4).reshape(b * to, cout, hp, wp)
    return out, num_frames // 2


if __name__ == "__main__":
    key = jax.random.PRNGKey(0)
    kx, kw2, kb2, kg, kbe, kw3, kb3 = jax.random.split(key, 7)

    # GroupNorm(32, out_channels) requires out_channels % 32 == 0; 128 keeps stores lane-dense.
    B, T, CIN, COUT, H, W = 2, 4, 16, 128, 16, 16
    x = jax.random.normal(kx, (B * T, CIN, H, W), jnp.float32)
    params = {
        "conv2d_w": 0.05 * jax.random.normal(kw2, (COUT, CIN, 3, 3), jnp.float32),
        "conv2d_b": 0.05 * jax.random.normal(kb2, (COUT,), jnp.float32),
        "gn_gamma": 1.0 + 0.1 * jax.random.normal(kg, (COUT,), jnp.float32),
        "gn_beta": 0.1 * jax.random.normal(kbe, (COUT,), jnp.float32),
        "conv3d_w": 0.05 * jax.random.normal(kw3, (COUT, COUT, 3, 1, 1), jnp.float32),
        "conv3d_b": 0.05 * jax.random.normal(kb3, (COUT,), jnp.float32),
    }

    out, nf = downsample3d_forward(x, params, num_frames=T)
    out = jax.block_until_ready(out)

    ref, nf_ref = _reference_forward(x, params, num_frames=T)
    assert out.shape == ref.shape == (B * (T // 2), COUT, H // 2, W // 2), (out.shape, ref.shape)
    assert nf == nf_ref == T // 2
    err = float(jnp.max(jnp.abs(out - ref)))
    assert err < 3e-2, f"max abs error too large: {err}"  # bf16 MXU operand pipeline
    print("KERNEL_OK")
</pallas_src>

<mosaic_0001>
module attributes {stable_mosaic.version = 11 : i64} {
  func.func @_spatial_conv_stats_kernel(%arg0: i32, %arg1: i32, %arg2: i32, %arg3: memref<1x1x2x64x144xbf16, #tpu.memory_space<vmem>>, %arg4: memref<144x128xbf16, #tpu.memory_space<vmem>>, %arg5: memref<1x128xf32, #tpu.memory_space<vmem>>, %arg6: memref<1x1x64x128xbf16, #tpu.memory_space<vmem>>, %arg7: memref<1x1x64x128xbf16, #tpu.memory_space<vmem>>, %arg8: memref<1x1x1x1x128xf32, #tpu.memory_space<vmem>>, %arg9: memref<1x1x1x1x128xf32, #tpu.memory_space<vmem>>) attributes {dimension_semantics = [#tpu.dimension_semantics<parallel>, #tpu.dimension_semantics<parallel>, #tpu.dimension_semantics<parallel>], iteration_bounds = array<i64: 2, 2, 1>, scalar_prefetch = 0 : i64, scratch_operands = 0 : i64, tpu.core_type = #tpu.core_type<tc>, window_params = [{transform_indices = @transform_0, window_bounds = array<i64: 1, 1, 2, 64, 144>}, {pipeline_mode = #tpu.pipeline_mode<synchronous>, transform_indices = @transform_1, window_bounds = array<i64: 144, 128>}, {pipeline_mode = #tpu.pipeline_mode<synchronous>, transform_indices = @transform_2, window_bounds = array<i64: 1, 128>}, {transform_indices = @transform_3, window_bounds = array<i64: 1, 1, 64, 128>}, {transform_indices = @transform_4, window_bounds = array<i64: 1, 1, 64, 128>}, {transform_indices = @transform_5, window_bounds = array<i64: 1, 1, 1, 1, 128>}, {transform_indices = @transform_6, window_bounds = array<i64: 1, 1, 1, 1, 128>}]} {
    %c0 = arith.constant 0 : index
    %c0_0 = arith.constant 0 : index
    %c0_1 = arith.constant 0 : index
    %c0_2 = arith.constant 0 : index
    %c0_3 = arith.constant 0 : index
    %0 = vector.load %arg3[%c0, %c0_0, %c0_1, %c0_2, %c0_3] : memref<1x1x2x64x144xbf16, #tpu.memory_space<vmem>>, vector<1x1x2x64x144xbf16>
    %1 = vector.shape_cast %0 : vector<1x1x2x64x144xbf16> to vector<2x64x144xbf16>
    %2 = vector.shape_cast %1 : vector<2x64x144xbf16> to vector<128x144xbf16>
    %c0_4 = arith.constant 0 : index
    %c0_5 = arith.constant 0 : index
    %3 = vector.load %arg4[%c0_4, %c0_5] : memref<144x128xbf16, #tpu.memory_space<vmem>>, vector<144x128xbf16>
    %cst = arith.constant dense<0.000000e+00> : vector<128x128xf32>
    %4 = tpu.matmul %2, %3, %cst {dimension_numbers = #tpu.dot_dimension_numbers<[1], [0], [0], [1], [0, 0, 1, 1], [], []>} : vector<128x144xbf16>, vector<144x128xbf16>, vector<128x128xf32> -> vector<128x128xf32>
    %c0_6 = arith.constant 0 : index
    %c0_7 = arith.constant 0 : index
    %5 = vector.load %arg5[%c0_6, %c0_7] : memref<1x128xf32, #tpu.memory_space<vmem>>, vector<1x128xf32>
    %6 = vector.broadcast %5 : vector<1x128xf32> to vector<128x128xf32>
    %7 = arith.addf %4, %6 : vector<128x128xf32>
    %8 = vector.extract_strided_slice %7 {offsets = [0, 0], sizes = [64, 128], strides = [1, 1]} : vector<128x128xf32> to vector<64x128xf32>
    %9 = arith.truncf %8 : vector<64x128xf32> to vector<64x128xbf16>
    %c0_8 = arith.constant 0 : index
    %c0_9 = arith.constant 0 : index
    %c0_10 = arith.constant 0 : index
    %c0_11 = arith.constant 0 : index
    %10 = vector.load %arg6[%c0_8, %c0_9, %c0_10, %c0_11] : memref<1x1x64x128xbf16, #tpu.memory_space<vmem>>, vector<1x1x64x128xbf16>
    %11 = vector.shape_cast %10 : vector<1x1x64x128xbf16> to vector<64x128xbf16>
    %12 = vector.shape_cast %9 : vector<64x128xbf16> to vector<1x1x64x128xbf16>
    tpu.vector_store %arg6[%c0_8, %c0_9, %c0_10, %c0_11], %12 {strides = array<i32>} : memref<1x1x64x128xbf16, #tpu.memory_space<vmem>>, vector<1x1x64x128xbf16>,
    %13 = vector.extract_strided_slice %7 {offsets = [64, 0], sizes = [64, 128], strides = [1, 1]} : vector<128x128xf32> to vector<64x128xf32>
    %14 = arith.truncf %13 : vector<64x128xf32> to vector<64x128xbf16>
    %c0_12 = arith.constant 0 : index
    %c0_13 = arith.constant 0 : index
    %c0_14 = arith.constant 0 : index
    %c0_15 = arith.constant 0 : index
    %15 = vector.load %arg7[%c0_12, %c0_13, %c0_14, %c0_15] : memref<1x1x64x128xbf16, #tpu.memory_space<vmem>>, vector<1x1x64x128xbf16>
    %16 = vector.shape_cast %15 : vector<1x1x64x128xbf16> to vector<64x128xbf16>
    %17 = vector.shape_cast %14 : vector<64x128xbf16> to vector<1x1x64x128xbf16>
    tpu.vector_store %arg7[%c0_12, %c0_13, %c0_14, %c0_15], %17 {strides = array<i32>} : memref<1x1x64x128xbf16, #tpu.memory_space<vmem>>, vector<1x1x64x128xbf16>,
    %cst_16 = arith.constant dense<0.000000e+00> : vector<128xf32>
    %18 = vector.multi_reduction <add>, %7, %cst_16 [0] : vector<128x128xf32> to vector<128xf32>
    %19 = vector.shape_cast %18 : vector<128xf32> to vector<1x128xf32>
    %cst_17 = arith.constant 7.812500e-03 : f32
    %20 = vector.broadcast %cst_17 : f32 to vector<1x128xf32>
    %21 = arith.mulf %19, %20 : vector<1x128xf32>
    %22 = vector.broadcast %21 : vector<1x128xf32> to vector<128x128xf32>
    %23 = arith.subf %7, %22 : vector<128x128xf32>
    %c0_18 = arith.constant 0 : index
    %c0_19 = arith.constant 0 : index
    %c0_20 = arith.constant 0 : index
    %c0_21 = arith.constant 0 : index
    %c0_22 = arith.constant 0 : index
    %24 = vector.load %arg8[%c0_18, %c0_19, %c0_20, %c0_21, %c0_22] : memref<1x1x1x1x128xf32, #tpu.memory_space<vmem>>, vector<1x1x1x1x128xf32>
    %25 = vector.shape_cast %24 : vector<1x1x1x1x128xf32> to vector<1x128xf32>
    %26 = vector.shape_cast %21 : vector<1x128xf32> to vector<1x1x1x1x128xf32>
    tpu.vector_store %arg8[%c0_18, %c0_19, %c0_20, %c0_21, %c0_22], %26 {strides = array<i32>} : memref<1x1x1x1x128xf32, #tpu.memory_space<vmem>>, vector<1x1x1x1x128xf32>,
    %27 = arith.mulf %23, %23 : vector<128x128xf32>
    %cst_23 = arith.constant dense<0.000000e+00> : vector<128xf32>
    %28 = vector.multi_reduction <add>, %27, %cst_23 [0] : vector<128x128xf32> to vector<128xf32>
    %29 = vector.shape_cast %28 : vector<128xf32> to vector<1x128xf32>
    %c0_24 = arith.constant 0 : index
    %c0_25 = arith.constant 0 : index
    %c0_26 = arith.constant 0 : index
    %c0_27 = arith.constant 0 : index
    %c0_28 = arith.constant 0 : index
    %30 = vector.load %arg9[%c0_24, %c0_25, %c0_26, %c0_27, %c0_28] : memref<1x1x1x1x128xf32, #tpu.memory_space<vmem>>, vector<1x1x1x1x128xf32>
    %31 = vector.shape_cast %30 : vector<1x1x1x1x128xf32> to vector<1x128xf32>
    %32 = vector.shape_cast %29 : vector<1x128xf32> to vector<1x1x1x1x128xf32>
    tpu.vector_store %arg9[%c0_24, %c0_25, %c0_26, %c0_27, %c0_28], %32 {strides = array<i32>} : memref<1x1x1x1x128xf32, #tpu.memory_space<vmem>>, vector<1x1x1x1x128xf32>,
    return
  }
  func.func @transform_0(%arg0: i32, %arg1: i32, %arg2: i32) -> (i32, i32, i32, i32, i32) {
    %c0_i32 = arith.constant 0 : i32
    %c0_i32_0 = arith.constant 0 : i32
    %c0_i32_1 = arith.constant 0 : i32
    return %arg0, %arg1, %c0_i32, %arg2, %c0_i32_0 : i32, i32, i32, i32, i32
  }
  func.func @transform_1(%arg0: i32, %arg1: i32, %arg2: i32) -> (i32, i32) {
    %c0_i32 = arith.constant 0 : i32
    %c0_i32_0 = arith.constant 0 : i32
    %c0_i32_1 = arith.constant 0 : i32
    return %c0_i32, %c0_i32_0 : i32, i32
  }
  func.func @transform_2(%arg0: i32, %arg1: i32, %arg2: i32) -> (i32, i32) {
    %c0_i32 = arith.constant 0 : i32
    %c0_i32_0 = arith.constant 0 : i32
    %c0_i32_1 = arith.constant 0 : i32
    return %c0_i32, %c0_i32_0 : i32, i32
  }
  func.func @transform_3(%arg0: i32, %arg1: i32, %arg2: i32) -> (i32, i32, i32, i32) {
    %c0_i32 = arith.constant 0 : i32
    %c0_i32_0 = arith.constant 0 : i32
    return %arg0, %arg1, %arg2, %c0_i32 : i32, i32, i32, i32
  }
  func.func @transform_4(%arg0: i32, %arg1: i32, %arg2: i32) -> (i32, i32, i32, i32) {
    %c0_i32 = arith.constant 0 : i32
    %c0_i32_0 = arith.constant 0 : i32
    return %arg0, %arg1, %arg2, %c0_i32 : i32, i32, i32, i32
  }
  func.func @transform_5(%arg0: i32, %arg1: i32, %arg2: i32) -> (i32, i32, i32, i32, i32) {
    %c0_i32 = arith.constant 0 : i32
    %c0_i32_0 = arith.constant 0 : i32
    %c0_i32_1 = arith.constant 0 : i32
    return %arg0, %arg1, %arg2, %c0_i32, %c0_i32_0 : i32, i32, i32, i32, i32
  }
  func.func @transform_6(%arg0: i32, %arg1: i32, %arg2: i32) -> (i32, i32, i32, i32, i32) {
    %c0_i32 = arith.constant 0 : i32
    %c0_i32_0 = arith.constant 0 : i32
    %c0_i32_1 = arith.constant 0 : i32
    return %arg0, %arg1, %arg2, %c0_i32, %c0_i32_0 : i32, i32, i32, i32, i32
  }
}

</mosaic_0001>

<llo_original>
// kernel: tpu_custom_call.1
$region0: #{tpu_custom_call.1}
  #allocation0 [shape = 'u32[]', space=smem, size = 0x4, offset = 0x4, fixed_abs, tag = 'smem constant byte address 0x4 - core index']
  #allocation1 [shape = 'u32[144,128]{1,0:T(1,128)}', space=vmem, size = 0x12000, scoped, tag = 'internal scratch']
  %s0 = inlined_call_operand.hbm [shape: bf16[2,2,2,64,144], index: 0, kind: input, shape index: {}]
  %s1 = inlined_call_operand.hbm [shape: bf16[144,128], index: 1, kind: input, shape index: {}]
  %s2 = inlined_call_operand.vmem [shape: f32[1,128], index: 2, kind: input, shape index: {}]
  %s3 = inlined_call_operand.hbm [shape: bf16[2,2,64,128], index: 3, kind: output, shape index: {0}]
  %s4 = inlined_call_operand.hbm [shape: bf16[2,2,64,128], index: 4, kind: output, shape index: {1}]
  %s5 = inlined_call_operand.hbm [shape: f32[2,2,1,1,128], index: 5, kind: output, shape index: {2}]
  %s6 = inlined_call_operand.hbm [shape: f32[2,2,1,1,128], index: 6, kind: output, shape index: {3}]
  %7 = xla_tuple %s3, %s4, %s5, %s6
  %s8 = sld [smem:[#allocation0]]
  $region77: #{tpu_custom_call.1} parent=0
    _
  %s10 = ssub.s32 1, %s8
  %s11 = scalar_select 0, %s10, %s8
  $region1: #{tpu_custom_call.1} parent=0
    #allocation2 [shape = 'u8[131072]{0}', space=vmem, size = 0x20000, scoped, tag = 'input window, operand 0']
    #allocation3 [shape = 's32[2]{0}', space=sflag, size = 0x8, scoped, tag = 'scoped memory for tpu_custom_call.1']
    #allocation4 [shape = 's32[2]{0}', space=sflag, size = 0x8, scoped, tag = 'scoped memory for tpu_custom_call.1']
    #allocation5 [shape = 'u8[36864]{0}', space=vmem, size = 0x9000, scoped, tag = 'input window, operand 1, single buffered']
    #allocation6 [shape = 's32[1]{0}', space=sflag, size = 0x4, scoped, tag = 'scoped memory for tpu_custom_call.1']
    #allocation7 [shape = 'u8[32768]{0}', space=vmem, size = 0x8000, scoped, tag = 'output window, operand 0']
    #allocation8 [shape = 'u8[32768]{0}', space=vmem, size = 0x8000, scoped, tag = 'output window, operand 1']
    #allocation9 [shape = 's32[2]{0}', space=sflag, size = 0x8, scoped, tag = 'scoped memory for tpu_custom_call.1']
    #allocation10 [shape = 'u8[1024]{0}', space=vmem, size = 0x400, scoped, tag = 'output window, operand 2']
    #allocation11 [shape = 'u8[1024]{0}', space=vmem, size = 0x400, scoped, tag = 'output window, operand 3']
    #allocation12 [shape = 's32[2]{0}', space=sflag, size = 0x8, scoped, tag = 'scoped memory for tpu_custom_call.1']
    %12 = vsyncpa [#allocation3], 0
    %s13 = scalar_lea.sflag [#allocation3], 1
    %14 = vsyncpa %s13, 0
    %15 = vsyncpa [#allocation6], 0
    %16 = vsyncpa [#allocation4], 0
    %s17 = scalar_lea.sflag [#allocation4], 1
    %18 = vsyncpa %s17, 0
    %19 = vsyncpa [#allocation9], 0
    %s20 = scalar_lea.sflag [#allocation9], 1
    %21 = vsyncpa %s20, 0
    %22 = vsyncpa [#allocation12], 0
    %s23 = scalar_lea.sflag [#allocation12], 1
    %24 = vsyncpa %s23, 0
    loop: start=0, step=1, limit=6
    $region2: #{tpu_custom_call.1} parent=1 // loop_pre_header
      _
    $region3: #{tpu_custom_call.1} parent=1 // loop_header
      %s26 = sphi 0, %s30
      %p27 = scmp.ge.s32.totalorder %s26, 6
      %s33 = sphi 0, %s52
      %s34 = sphi 0, %s48
      %s35 = sphi 0, %s44
      %s36 = sphi 0, %s33
      %s37 = sphi 0, %s34
      %s38 = sphi 0, %s35
      %s39 = sphi 0, %s36
      %s40 = sphi 0, %s37
      %s41 = sphi 0, %s38
      %s59 = sphi 0, %s61
      %s62 = sphi 0, %s59
      %s63 = sphi 0, %s62
      %s79 = sphi 0, %s63
      %s83 = sphi 0, %s83
      %s85 = sphi 0, %s83
      %s86 = sphi 0, %s85
      %s100 = sphi 0, %s86
      %s104 = sphi 0, %s104
      %s106 = sphi 0, %s104
      %s107 = sphi 0, %s106
      %s121 = sphi 0, %s107
      %s131 = sphi 0, %s133
      %s134 = sphi 0, %s131
      %s135 = sphi 0, %s134
      %s151 = sphi 0, %s135
      %s161 = sphi 0, %s163
      %s164 = sphi 0, %s161
      %s165 = sphi 0, %s164
      %s181 = sphi 0, %s165
      %s191 = sphi 0, %s193
      %s194 = sphi 0, %s191
      %s195 = sphi 0, %s194
      %s211 = sphi 0, %s195
      %s221 = sphi 0, %s223
      %s224 = sphi 0, %s221
      %s225 = sphi 0, %s224
      %s241 = sphi 0, %s225
    $region4: #{tpu_custom_call.1} parent=1 // loop_header_branch
      %29 = sbr.rel (%p27) target = $region8
    $region5: #{tpu_custom_call.1} parent=1 // loop_body
      %s31 = ssub.s32 %s26, 1
      %s32 = ssub.s32 %s26, 2
      %s42 = sadd.s32 1, %s35
      %p43 = scmp.ge.s32.totalorder %s42, 1
      %s44 = scalar_select %p43, 0, %s42
      %s45 = sadd.s32 1, %s34
      %s46 = scalar_select %p43, %s45, %s34
      %p47 = scmp.ge.s32.totalorder %s46, 2
      %s48 = scalar_select %p47, 0, %s46
      %s49 = sadd.s32 1, %s33
      %s50 = scalar_select %p47, %s49, %s33
      %p51 = scmp.ge.s32.totalorder %s50, 2
      %s52 = scalar_select %p51, 0, %s50
      %s53 = ssub.s32 %s33, %s52
      %s54 = ssub.s32 %s34, %s48
      %s55 = sor.u32 %s53, %s54
      %s56 = ssub.s32 %s35, %s44
      %s57 = sor.u32 %s55, %s56
      %p58 = scmp.eq.s32.totalorder %s57, 0
      %s60 = sadd.s32 %s59, 1
      %s61 = scalar_select %p58, %s59, %s60
      %p64 = pneg %p58
      %p65 = scmp.eq.s32.totalorder %s26, 3
      %p66 = por %p64, %p65
      %p67 = scmp.ne.s32.totalorder %s59, %s62
      %p68 = scmp.eq.s32.totalorder %s26, 0
      %p69 = por %p67, %p68
      %p70 = scmp.ne.s32.totalorder %s59, %s62
      %p71 = scmp.eq.s32.totalorder %s31, 3
      %p72 = por %p70, %p71
      %p73 = scmp.ne.s32.totalorder %s62, %s63
      %p74 = scmp.eq.s32.totalorder %s31, 0
      %p75 = por %p73, %p74
      %p76 = scmp.ne.s32.totalorder %s62, %s63
      %p77 = scmp.eq.s32.totalorder %s32, 3
      %p78 = por %p76, %p77
      %p80 = scmp.ne.s32.totalorder %s63, %s79
      %p81 = scmp.eq.s32.totalorder %s32, 0
      %p82 = por %p80, %p81
      %s84 = sadd.s32 %s83, 1
      %p87 = scmp.eq.s32.totalorder %s26, 3
      %p88 = scmp.ne.s32.totalorder %s83, %s85
      %p89 = scmp.eq.s32.totalorder %s26, 0
      %p90 = por %p88, %p89
      %p91 = scmp.ne.s32.totalorder %s83, %s85
      %p92 = scmp.eq.s32.totalorder %s31, 3
      %p93 = por %p91, %p92
      %p94 = scmp.ne.s32.totalorder %s85, %s86
      %p95 = scmp.eq.s32.totalorder %s31, 0
      %p96 = por %p94, %p95
      %p97 = scmp.ne.s32.totalorder %s85, %s86
      %p98 = scmp.eq.s32.totalorder %s32, 3
      %p99 = por %p97, %p98
      %p101 = scmp.ne.s32.totalorder %s86, %s100
      %p102 = scmp.eq.s32.totalorder %s32, 0
      %p103 = por %p101, %p102
      %s105 = sadd.s32 %s104, 1
      %p108 = scmp.eq.s32.totalorder %s26, 3
      %p109 = scmp.ne.s32.totalorder %s104, %s106
      %p110 = scmp.eq.s32.totalorder %s26, 0
      %p111 = por %p109, %p110
      %p112 = scmp.ne.s32.totalorder %s104, %s106
      %p113 = scmp.eq.s32.totalorder %s31, 3
      %p114 = por %p112, %p113
      %p115 = scmp.ne.s32.totalorder %s106, %s107
      %p116 = scmp.eq.s32.totalorder %s31, 0
      %p117 = por %p115, %p116
      %p118 = scmp.ne.s32.totalorder %s106, %s107
      %p119 = scmp.eq.s32.totalorder %s32, 3
      %p120 = por %p118, %p119
      %p122 = scmp.ne.s32.totalorder %s107, %s121
      %p123 = scmp.eq.s32.totalorder %s32, 0
      %p124 = por %p122, %p123
      %s125 = ssub.s32 %s33, %s52
      %s126 = ssub.s32 %s34, %s48
      %s127 = sor.u32 %s125, %s126
      %s128 = ssub.s32 %s35, %s44
      %s129 = sor.u32 %s127, %s128
      %p130 = scmp.eq.s32.totalorder %s129, 0
      %s132 = sadd.s32 %s131, 1
      %s133 = scalar_select %p130, %s131, %s132
      %p136 = pneg %p130
      %p137 = scmp.eq.s32.totalorder %s26, 3
      %p138 = por %p136, %p137
      %p139 = scmp.ne.s32.totalorder %s131, %s134
      %p140 = scmp.eq.s32.totalorder %s26, 0
      %p141 = por %p139, %p140
      %p142 = scmp.ne.s32.totalorder %s131, %s134
      %p143 = scmp.eq.s32.totalorder %s31, 3
      %p144 = por %p142, %p143
      %p145 = scmp.ne.s32.totalorder %s134, %s135
      %p146 = scmp.eq.s32.totalorder %s31, 0
      %p147 = por %p145, %p146
      %p148 = scmp.ne.s32.totalorder %s134, %s135
      %p149 = scmp.eq.s32.totalorder %s32, 3
      %p150 = por %p148, %p149
      %p152 = scmp.ne.s32.totalorder %s135, %s151
      %p153 = scmp.eq.s32.totalorder %s32, 0
      %p154 = por %p152, %p153
      %s155 = ssub.s32 %s33, %s52
      %s156 = ssub.s32 %s34, %s48
      %s157 = sor.u32 %s155, %s156
      %s158 = ssub.s32 %s35, %s44
      %s159 = sor.u32 %s157, %s158
      %p160 = scmp.eq.s32.totalorder %s159, 0
      %s162 = sadd.s32 %s161, 1
      %s163 = scalar_select %p160, %s161, %s162
      %p166 = pneg %p160
      %p167 = scmp.eq.s32.totalorder %s26, 3
      %p168 = por %p166, %p167
      %p169 = scmp.ne.s32.totalorder %s161, %s164
      %p170 = scmp.eq.s32.totalorder %s26, 0
      %p171 = por %p169, %p170
      %p172 = scmp.ne.s32.totalorder %s161, %s164
      %p173 = scmp.eq.s32.totalorder %s31, 3
      %p174 = por %p172, %p173
      %p175 = scmp.ne.s32.totalorder %s164, %s165
      %p176 = scmp.eq.s32.totalorder %s31, 0
      %p177 = por %p175, %p176
      %p178 = scmp.ne.s32.totalorder %s164, %s165
      %p179 = scmp.eq.s32.totalorder %s32, 3
      %p180 = por %p178, %p179
      %p182 = scmp.ne.s32.totalorder %s165, %s181
      %p183 = scmp.eq.s32.totalorder %s32, 0
      %p184 = por %p182, %p183
      %s185 = ssub.s32 %s33, %s52
      %s186 = ssub.s32 %s34, %s48
      %s187 = sor.u32 %s185, %s186
      %s188 = ssub.s32 %s35, %s44
      %s189 = sor.u32 %s187, %s188
      %p190 = scmp.eq.s32.totalorder %s189, 0
      %s192 = sadd.s32 %s191, 1
      %s193 = scalar_select %p190, %s191, %s192
      %p196 = pneg %p190
      %p197 = scmp.eq.s32.totalorder %s26, 3
      %p198 = por %p196, %p197
      %p199 = scmp.ne.s32.totalorder %s191, %s194
      %p200 = scmp.eq.s32.totalorder %s26, 0
      %p201 = por %p199, %p200
      %p202 = scmp.ne.s32.totalorder %s191, %s194
      %p203 = scmp.eq.s32.totalorder %s31, 3
      %p204 = por %p202, %p203
      %p205 = scmp.ne.s32.totalorder %s194, %s195
      %p206 = scmp.eq.s32.totalorder %s31, 0
      %p207 = por %p205, %p206
      %p208 = scmp.ne.s32.totalorder %s194, %s195
      %p209 = scmp.eq.s32.totalorder %s32, 3
      %p210 = por %p208, %p209
      %p212 = scmp.ne.s32.totalorder %s195, %s211
      %p213 = scmp.eq.s32.totalorder %s32, 0
      %p214 = por %p212, %p213
      %s215 = ssub.s32 %s33, %s52
      %s216 = ssub.s32 %s34, %s48
      %s217 = sor.u32 %s215, %s216
      %s218 = ssub.s32 %s35, %s44
      %s219 = sor.u32 %s217, %s218
      %p220 = scmp.eq.s32.totalorder %s219, 0
      %s222 = sadd.s32 %s221, 1
      %s223 = scalar_select %p220, %s221, %s222
      %p226 = pneg %p220
      %p227 = scmp.eq.s32.totalorder %s26, 3
      %p228 = por %p226, %p227
      %p229 = scmp.ne.s32.totalorder %s221, %s224
      %p230 = scmp.eq.s32.totalorder %s26, 0
      %p231 = por %p229, %p230
      %p232 = scmp.ne.s32.totalorder %s221, %s224
      %p233 = scmp.eq.s32.totalorder %s31, 3
      %p234 = por %p232, %p233
      %p235 = scmp.ne.s32.totalorder %s224, %s225
      %p236 = scmp.eq.s32.totalorder %s31, 0
      %p237 = por %p235, %p236
      %p238 = scmp.ne.s32.totalorder %s224, %s225
      %p239 = scmp.eq.s32.totalorder %s32, 3
      %p240 = por %p238, %p239
      %p242 = scmp.ne.s32.totalorder %s225, %s241
      %p243 = scmp.eq.s32.totalorder %s32, 0
      %p244 = por %p242, %p243
      %p245 = scmp.le.s32.totalorder 1, %s26
      %p246 = scmp.lt.s32.totalorder %s26, 5
      %p247 = pnand %p245, %p246
      %p248 = pneg %p247
      // Predicated region
      $region9: #{tpu_custom_call.1} parent=5 // pred_check
        _
      $region10: #{tpu_custom_call.1} parent=5 // pred_check_branch
        %250 = sbr.rel (%p247) target = $region12
      $region11: #{tpu_custom_call.1} parent=5 // pred_region
        %s251 = ssub.s32 %s26, 1
        // Predicated region
        $region13: #{tpu_custom_call.1} parent=11 // pred_check
          %p252 = pneg %p96
        $region14: #{tpu_custom_call.1} parent=11 // pred_check_branch
          %254 = sbr.rel (%p252) target = $region16
        $region15: #{tpu_custom_call.1} parent=11 // pred_region
          %s256 = ssub.s32 1152, 1152
          %257 = vsyncadd [#allocation6], %s256
          %s258 = sshll.u32 [#allocation5], 4
          %s259 = int_to_ptr.vmem [resolvable:$true] %s258
          %264 = dma.hbm_to_vmem [thread:$0]  %s1, 1152, %s259, [#allocation6], 64, 64, 4
        $region16: #{tpu_custom_call.1} parent=11 // pred_fallthru
          _
        // Predicated region
        $region17: #{tpu_custom_call.1} parent=11 // pred_check
          %p265 = pneg %p117
        $region18: #{tpu_custom_call.1} parent=11 // pred_check_branch
          %267 = sbr.rel (%p265) target = $region20
        $region19: #{tpu_custom_call.1} parent=11 // pred_region
          _
        $region20: #{tpu_custom_call.1} parent=11 // pred_fallthru
          _
      $region12: #{tpu_custom_call.1} parent=5 // pred_fallthru
        _
      %p268 = scmp.lt.s32.totalorder %s26, 4
      // Predicated region
      $region21: #{tpu_custom_call.1} parent=5 // pred_check
        %p269 = pneg %p268
      $region22: #{tpu_custom_call.1} parent=5 // pred_check_branch
        %271 = sbr.rel (%p269) target = $region24
      $region23: #{tpu_custom_call.1} parent=5 // pred_region
        // Predicated region
        $region25: #{tpu_custom_call.1} parent=23 // pred_check
          %p272 = pneg %p69
        $region26: #{tpu_custom_call.1} parent=23 // pred_check_branch
          %274 = sbr.rel (%p272) target = $region28
        $region27: #{tpu_custom_call.1} parent=23 // pred_region
          %s275 = sand.u32 %s59, 1
          %s276 = scalar_lea.sflag [#allocation3], %s275
          %s277 = sand.u32 %s59, 1
          %s278 = smul.addr %s277, 128
          %s279 = scalar_lea.vmem [#allocation2], %s278
          %s280 = smul.u32 8, %s35
          %s282 = ssub.s32 2048, 2048
          %283 = vsyncadd %s276, %s282
          %s284 = smul.addr %s280, 2
          %s285 = smul.addr %s34, 32
          %s286 = sadd.s32 %s284, %s285
          %s287 = smul.addr %s33, 64
          %s288 = sadd.s32 %s286, %s287
          %s289 = smul.addr %s288, 64
          %s290 = scalar_lea.hbm %s0, %s289
          %s291 = sshll.u32 %s279, 4
          %s292 = int_to_ptr.vmem [resolvable:$true] %s291
          %297 = dma.hbm_to_vmem [thread:$0]  %s290, 2048, %s292, %s276, 128, 128, 8
        $region28: #{tpu_custom_call.1} parent=23 // pred_fallthru
          _
      $region24: #{tpu_custom_call.1} parent=5 // pred_fallthru
        _
      %p298 = scmp.le.s32.totalorder 1, %s26
      %p299 = scmp.lt.s32.totalorder %s26, 5
      %p300 = pnand %p298, %p299
      %p301 = pneg %p300
      // Predicated region
      $region29: #{tpu_custom_call.1} parent=5 // pred_check
        _
      $region30: #{tpu_custom_call.1} parent=5 // pred_check_branch
        %303 = sbr.rel (%p300) target = $region32
      $region31: #{tpu_custom_call.1} parent=5 // pred_region
        %s304 = ssub.s32 %s26, 1
        %s305 = sand.u32 %s62, 1
        %s306 = scalar_lea.sflag [#allocation3], %s305
        %s307 = sand.u32 %s62, 1
        %s308 = smul.addr %s307, 128
        %s309 = scalar_lea.vmem [#allocation2], %s308
        // Predicated region
        $region33: #{tpu_custom_call.1} parent=31 // pred_check
          %p310 = pneg %p75
        $region34: #{tpu_custom_call.1} parent=31 // pred_check_branch
          %312 = sbr.rel (%p310) target = $region36
        $region35: #{tpu_custom_call.1} parent=31 // pred_region
          %313 = dma.done %s306, 2048
        $region36: #{tpu_custom_call.1} parent=31 // pred_fallthru
          _
        // Predicated region
        $region37: #{tpu_custom_call.1} parent=31 // pred_check
          %p314 = pneg %p96
        $region38: #{tpu_custom_call.1} parent=31 // pred_check_branch
          %316 = sbr.rel (%p314) target = $region40
        $region39: #{tpu_custom_call.1} parent=31 // pred_region
          %317 = dma.done [#allocation6], 1152
        $region40: #{tpu_custom_call.1} parent=31 // pred_fallthru
          _
        %s318 = sand.u32 %s62, 1
        %s319 = scalar_lea.sflag [#allocation3], %s318
        %s320 = sand.u32 %s62, 1
        %s321 = smul.addr %s320, 128
        %s322 = scalar_lea.vmem [#allocation2], %s321
        %p323 = pneg %p75
        %p324 = pneg %p72
        %p325 = pneg %p96
        %p326 = pneg %p93
        %p327 = pneg %p117
        %p328 = pneg %p114
        %p329 = pneg %p147
        %p330 = pneg %p144
        %s331 = sand.u32 %s134, 1
        %s332 = scalar_lea.sflag [#allocation4], %s331
        %s333 = sand.u32 %s134, 1
        %s334 = smul.addr %s333, 32
        %s335 = scalar_lea.vmem [#allocation7], %s334
        %p336 = pneg %p177
        %p337 = pneg %p174
        %s338 = sand.u32 %s31, 1
        %s339 = scalar_lea.sflag [#allocation9], %s338
        %s340 = sand.u32 %s164, 1
        %s341 = smul.addr %s340, 32
        %s342 = scalar_lea.vmem [#allocation8], %s341
        %p343 = pneg %p207
        %p344 = pneg %p204
        %s345 = sand.u32 %s31, 1
        %s346 = scalar_lea.sflag [#allocation9], %s345
        %s347 = sand.u32 %s194, 1
        %s348 = scalar_lea.vmem [#allocation10], %s347
        %p349 = pneg %p237
        %p350 = pneg %p234
        %s351 = sand.u32 %s224, 1
        %s352 = scalar_lea.sflag [#allocation12], %s351
        %s353 = sand.u32 %s224, 1
        %s354 = scalar_lea.vmem [#allocation11], %s353
        %s355 = smul.u32 8, %s38
        %s356 = smul.u32 8, %s38
        %s357 = smul.u32 8, %s38
        %v359 = vld [vmem:[%s309] sm:$0xff]
        %v360 = vld [vmem:[%s309 + $0x8] sm:$0xff]
        %v361 = vld [vmem:[%s309 + $0x10] sm:$0xff]
        %v362 = vld [vmem:[%s309 + $0x18] sm:$0xff]
        %v363 = vld [vmem:[%s309 + $0x20] sm:$0xff]
        %v364 = vld [vmem:[%s309 + $0x28] sm:$0xff]
        %v365 = vld [vmem:[%s309 + $0x30] sm:$0xff]
        %v366 = vld [vmem:[%s309 + $0x38] sm:$0xff]
        %v367 = vld [vmem:[%s309 + $0x40] sm:$0xff]
        %v368 = vld [vmem:[%s309 + $0x48] sm:$0xff]
        %v369 = vld [vmem:[%s309 + $0x50] sm:$0xff]
        %v370 = vld [vmem:[%s309 + $0x58] sm:$0xff]
        %v371 = vld [vmem:[%s309 + $0x60] sm:$0xff]
        %v372 = vld [vmem:[%s309 + $0x68] sm:$0xff]
        %v373 = vld [vmem:[%s309 + $0x70] sm:$0xff]
        %v374 = vld [vmem:[%s309 + $0x78] sm:$0xff]
        %v375 = vld [vmem:[#allocation5] sm:$0xf]
        %v376 = vld [vmem:[#allocation5 + $0x4] sm:$0xf]
        %v377 = vld [vmem:[#allocation5 + $0x8] sm:$0xf]
        %v378 = vld [vmem:[#allocation5 + $0xc] sm:$0xf]
        %v379 = vld [vmem:[#allocation5 + $0x10] sm:$0xf]
        %v380 = vld [vmem:[#allocation5 + $0x14] sm:$0xf]
        %v381 = vld [vmem:[#allocation5 + $0x18] sm:$0xf]
        %v382 = vld [vmem:[#allocation5 + $0x1c] sm:$0xf]
        %v383 = vld [vmem:[#allocation5 + $0x20] sm:$0xf]
        %v384 = vld [vmem:[#allocation5 + $0x24] sm:$0xf]
        %v385 = vld [vmem:[#allocation5 + $0x28] sm:$0xf]
        %v386 = vld [vmem:[#allocation5 + $0x2c] sm:$0xf]
        %v387 = vld [vmem:[#allocation5 + $0x30] sm:$0xf]
        %v388 = vld [vmem:[#allocation5 + $0x34] sm:$0xf]
        %v389 = vld [vmem:[#allocation5 + $0x38] sm:$0xf]
        %v390 = vld [vmem:[#allocation5 + $0x3c] sm:$0xf]
        %v391 = vld [vmem:[#allocation5 + $0x40] sm:$0xf]
        %v392 = vld [vmem:[#allocation5 + $0x44] sm:$0xf]
        %v393 = vld [vmem:[%s2] sm:$0x1]
        %v395 = vlaneseq
        %v396 = vshrl.u32 %v395, 7
        %v397 = vsub.s32 0, %v396
        %v398 = vrot.slane %v393, %v397
        %v416 = vunpack.c.l.b16 %v359
        %v417 = vunpack.c.h.b16 %v359
        %v418 = vunpack.c.l.b16 %v360
        %v419 = vunpack.c.h.b16 %v360
        %v420 = vunpack.c.l.b16 %v361
        %v421 = vunpack.c.h.b16 %v361
        %v422 = vunpack.c.l.b16 %v362
        %v423 = vunpack.c.h.b16 %v362
        %v424 = vunpack.c.l.b16 %v363
        %v425 = vunpack.c.h.b16 %v363
        %v426 = vunpack.c.l.b16 %v364
        %v427 = vunpack.c.h.b16 %v364
        %v428 = vunpack.c.l.b16 %v365
        %v429 = vunpack.c.h.b16 %v365
        %v430 = vunpack.c.l.b16 %v366
        %v431 = vunpack.c.h.b16 %v366
        %v432 = vunpack.c.l.b16 %v367
        %v433 = vunpack.c.h.b16 %v367
        %v434 = vunpack.c.l.b16 %v368
        %v435 = vunpack.c.h.b16 %v368
        %v436 = vunpack.c.l.b16 %v369
        %v437 = vunpack.c.h.b16 %v369
        %v438 = vunpack.c.l.b16 %v370
        %v439 = vunpack.c.h.b16 %v370
        %v440 = vunpack.c.l.b16 %v371
        %v441 = vunpack.c.h.b16 %v371
        %v442 = vunpack.c.l.b16 %v372
        %v443 = vunpack.c.h.b16 %v372
        %v444 = vunpack.c.l.b16 %v373
        %v445 = vunpack.c.h.b16 %v373
        %v446 = vunpack.c.l.b16 %v374
        %v447 = vunpack.c.h.b16 %v374
        %v448 = vpack.c.b16 %v418, %v416
        %v449 = vpack.c.b16 %v419, %v417
        %v450 = vpack.c.b16 %v422, %v420
        %v451 = vpack.c.b16 %v423, %v421
        %v452 = vpack.c.b16 %v426, %v424
        %v453 = vpack.c.b16 %v427, %v425
        %v454 = vpack.c.b16 %v430, %v428
        %v455 = vpack.c.b16 %v431, %v429
        %v456 = vpack.c.b16 %v434, %v432
        %v457 = vpack.c.b16 %v435, %v433
        %v458 = vpack.c.b16 %v438, %v436
        %v459 = vpack.c.b16 %v439, %v437
        %v460 = vpack.c.b16 %v442, %v440
        %v461 = vpack.c.b16 %v443, %v441
        %v462 = vpack.c.b16 %v446, %v444
        %v463 = vpack.c.b16 %v447, %v445
        %v490 = vunpack.c.l.b16 %v375
        %v491 = vunpack.c.l.b16 %v376
        %v492 = vunpack.c.l.b16 %v377
        %v493 = vunpack.c.l.b16 %v378
        %v494 = vunpack.c.l.b16 %v379
        %v495 = vunpack.c.l.b16 %v380
        %v496 = vunpack.c.l.b16 %v381
        %v497 = vunpack.c.l.b16 %v382
        %v498 = vunpack.c.l.b16 %v383
        %v499 = vunpack.c.l.b16 %v384
        %v500 = vunpack.c.l.b16 %v385
        %v501 = vunpack.c.l.b16 %v386
        %v502 = vunpack.c.l.b16 %v387
        %v503 = vunpack.c.l.b16 %v388
        %v504 = vunpack.c.l.b16 %v389
        %v505 = vunpack.c.l.b16 %v390
        %v506 = vunpack.c.l.b16 %v391
        %v507 = vunpack.c.l.b16 %v392
        %v508 = vpack.c.b16 %v491, %v490
        %v509 = vpack.c.b16 %v493, %v492
        %v510 = vpack.c.b16 %v495, %v494
        %v511 = vpack.c.b16 %v497, %v496
        %v512 = vpack.c.b16 %v499, %v498
        %v513 = vpack.c.b16 %v501, %v500
        %v514 = vpack.c.b16 %v503, %v502
        %v515 = vpack.c.b16 %v505, %v504
        %v516 = vpack.c.b16 %v507, %v506
        %vm526 = vcmask 130048
        %v528 = vsel %vm526, %v449, 0
        %v531 = vsel %vm526, %v451, 0
        %v534 = vsel %vm526, %v453, 0
        %v537 = vsel %vm526, %v455, 0
        %v540 = vsel %vm526, %v457, 0
        %v543 = vsel %vm526, %v459, 0
        %v546 = vsel %vm526, %v461, 0
        %v549 = vsel %vm526, %v463, 0
        %551 = vmatprep.subr.bf16.mxu0 0
        %552 = vmatpush1.bf16.msra.mxu0 %v508
        %553 = vmatprep.subr.bf16.mxu0 0
        %554 = vmatpush1.bf16.msra.mxu0 %v509
        %555 = vmatprep.subr.bf16.mxu0 0
        %556 = vmatpush1.bf16.msra.mxu0 %v510
        %557 = vmatprep.subr.bf16.mxu0 0
        %558 = vmatpush1.bf16.msra.mxu0 %v511
        %559 = vmatprep.subr.bf16.mxu0 0
        %560 = vmatpush1.bf16.msra.mxu0 %v512
        %561 = vmatprep.subr.bf16.mxu0 0
        %562 = vmatpush1.bf16.msra.mxu0 %v513
        %563 = vmatprep.subr.bf16.mxu0 0
        %564 = vmatpush1.bf16.msra.mxu0 %v514
        %565 = vmatprep.subr.bf16.mxu0 0
        %566 = vmatpush1.bf16.msra.mxu0 %v515
        %567 = vmatprep.subr.bf16.mxu0 0
        %568 = vmatpush1.bf16.msra.mxu0 %v516
        %569 = vmatprep.subr.bf16.mxu0 0
        %570 = vmatpush1.bf16.msra.mxu0 0
        %571 = vmatprep.subr.bf16.mxu0 0
        %572 = vmatpush1.bf16.msra.mxu0 0
        %573 = vmatprep.subr.bf16.mxu0 0
        %574 = vmatpush1.bf16.msra.mxu0 0
        %575 = vmatprep.subr.bf16.mxu0 0
        %576 = vmatpush1.bf16.msra.mxu0 0
        %577 = vmatprep.subr.bf16.mxu0 0
        %578 = vmatpush1.bf16.msra.mxu0 0
        %579 = vmatprep.subr.bf16.mxu0 0
        %580 = vmatpush1.bf16.msra.mxu0 0
        %581 = vmatprep.subr.bf16.mxu0 0
        %582 = vmatpush1.bf16.msra.mxu0 0
        %583 = vmatprep.mubr.bf16.mxu0 %v528
        %584 = vmatmul.mubr.bf16.gmra.mrb[0].mxu0 %v448
        %v585 = vpop.f32.mrb[0].mxu0
        %v586 = vadd.f32 %v398, %v585
        %v587 = vpop.f32.mrb[0].mxu0
        %v588 = vpop.f32.mrb[0].mxu0
        %v589 = vadd.f32 %v398, %v588
        %v590 = vpop.f32.mrb[0].mxu0
        %591 = vmatprep.mubr.bf16.mxu0 %v531
        %592 = vmatmul.mubr.bf16.gmra.mrb[0].mxu0 %v450
        %v593 = vpop.f32.mrb[0].mxu0
        %v594 = vadd.f32 %v398, %v593
        %v595 = vpop.f32.mrb[0].mxu0
        %v596 = vpop.f32.mrb[0].mxu0
        %v597 = vadd.f32 %v398, %v596
        %v598 = vpop.f32.mrb[0].mxu0
        %599 = vmatprep.mubr.bf16.mxu0 %v534
        %600 = vmatmul.mubr.bf16.gmra.mrb[0].mxu0 %v452
        %v601 = vpop.f32.mrb[0].mxu0
        %v602 = vadd.f32 %v398, %v601
        %v603 = vpop.f32.mrb[0].mxu0
        %v604 = vpop.f32.mrb[0].mxu0
        %v605 = vadd.f32 %v398, %v604
        %v606 = vpop.f32.mrb[0].mxu0
        %607 = vmatprep.mubr.bf16.mxu0 %v537
        %608 = vmatmul.mubr.bf16.gmra.mrb[0].mxu0 %v454
        %v609 = vpop.f32.mrb[0].mxu0
        %v610 = vadd.f32 %v398, %v609
        %v611 = vpop.f32.mrb[0].mxu0
        %v612 = vpop.f32.mrb[0].mxu0
        %v613 = vadd.f32 %v398, %v612
        %v614 = vpop.f32.mrb[0].mxu0
        %615 = vmatprep.mubr.bf16.mxu0 %v540
        %616 = vmatmul.mubr.bf16.gmra.mrb[0].mxu0 %v456
        %v617 = vpop.f32.mrb[0].mxu0
        %v618 = vadd.f32 %v398, %v617
        %v619 = vpop.f32.mrb[0].mxu0
        %v620 = vpop.f32.mrb[0].mxu0
        %v621 = vadd.f32 %v398, %v620
        %v622 = vpop.f32.mrb[0].mxu0
        %623 = vmatprep.mubr.bf16.mxu0 %v543
        %624 = vmatmul.mubr.bf16.gmra.mrb[0].mxu0 %v458
        %v625 = vpop.f32.mrb[0].mxu0
        %v626 = vadd.f32 %v398, %v625
        %v627 = vpop.f32.mrb[0].mxu0
        %v628 = vpop.f32.mrb[0].mxu0
        %v629 = vadd.f32 %v398, %v628
        %v630 = vpop.f32.mrb[0].mxu0
        %631 = vmatprep.mubr.bf16.mxu0 %v546
        %632 = vmatmul.mubr.bf16.gmra.mrb[0].mxu0 %v460
        %v633 = vpop.f32.mrb[0].mxu0
        %v634 = vadd.f32 %v398, %v633
        %v635 = vpop.f32.mrb[0].mxu0
        %v636 = vpop.f32.mrb[0].mxu0
        %v637 = vadd.f32 %v398, %v636
        %v638 = vpop.f32.mrb[0].mxu0
        %639 = vmatprep.mubr.bf16.mxu0 %v549
        %640 = vmatmul.mubr.bf16.gmra.mrb[0].mxu0 %v462
        %v641 = vpop.f32.mrb[0].mxu0
        %v642 = vadd.f32 %v398, %v641
        %v643 = vpop.f32.mrb[0].mxu0
        %v644 = vpop.f32.mrb[0].mxu0
        %v645 = vadd.f32 %v398, %v644
        %v646 = vpop.f32.mrb[0].mxu0
        %647 = vdwg.mxu0
        %v648 = vpack.c.bf16 %v589, %v586
        %v649 = vpack.c.bf16 %v597, %v594
        %v650 = vpack.c.bf16 %v605, %v602
        %v651 = vpack.c.bf16 %v613, %v610
        %v656 = vunpack.c.l.b16 %v648
        %v657 = vunpack.c.h.b16 %v648
        %v658 = vunpack.c.l.b16 %v649
        %v659 = vunpack.c.h.b16 %v649
        %v660 = vunpack.c.l.b16 %v650
        %v661 = vunpack.c.h.b16 %v650
        %v662 = vunpack.c.l.b16 %v651
        %v663 = vunpack.c.h.b16 %v651
        %v664 = vpack.c.b16 %v656, %v656
        %v665 = vpack.c.b16 %v657, %v657
        %v666 = vpack.c.b16 %v658, %v658
        %v667 = vpack.c.b16 %v659, %v659
        %v668 = vpack.c.b16 %v660, %v660
        %v669 = vpack.c.b16 %v661, %v661
        %v670 = vpack.c.b16 %v662, %v662
        %v671 = vpack.c.b16 %v663, %v663
        %680 = vst [vmem:[%s335] sm:$0xf] %v664
        %681 = vst [vmem:[%s335 + $0x4] sm:$0xf] %v665
        %682 = vst [vmem:[%s335 + $0x8] sm:$0xf] %v666
        %683 = vst [vmem:[%s335 + $0xc] sm:$0xf] %v667
        %684 = vst [vmem:[%s335 + $0x10] sm:$0xf] %v668
        %685 = vst [vmem:[%s335 + $0x14] sm:$0xf] %v669
        %686 = vst [vmem:[%s335 + $0x18] sm:$0xf] %v670
        %687 = vst [vmem:[%s335 + $0x1c] sm:$0xf] %v671
        %v688 = vpack.c.bf16 %v621, %v618
        %v689 = vpack.c.bf16 %v629, %v626
        %v690 = vpack.c.bf16 %v637, %v634
        %v691 = vpack.c.bf16 %v645, %v642
        %v696 = vunpack.c.l.b16 %v688
        %v697 = vunpack.c.h.b16 %v688
        %v698 = vunpack.c.l.b16 %v689
        %v699 = vunpack.c.h.b16 %v689
        %v700 = vunpack.c.l.b16 %v690
        %v701 = vunpack.c.h.b16 %v690
        %v702 = vunpack.c.l.b16 %v691
        %v703 = vunpack.c.h.b16 %v691
        %v704 = vpack.c.b16 %v696, %v696
        %v705 = vpack.c.b16 %v697, %v697
        %v706 = vpack.c.b16 %v698, %v698
        %v707 = vpack.c.b16 %v699, %v699
        %v708 = vpack.c.b16 %v700, %v700
        %v709 = vpack.c.b16 %v701, %v701
        %v710 = vpack.c.b16 %v702, %v702
        %v711 = vpack.c.b16 %v703, %v703
        %720 = vst [vmem:[%s342] sm:$0xf] %v704
        %721 = vst [vmem:[%s342 + $0x4] sm:$0xf] %v705
        %722 = vst [vmem:[%s342 + $0x8] sm:$0xf] %v706
        %723 = vst [vmem:[%s342 + $0xc] sm:$0xf] %v707
        %724 = vst [vmem:[%s342 + $0x10] sm:$0xf] %v708
        %725 = vst [vmem:[%s342 + $0x14] sm:$0xf] %v709
        %726 = vst [vmem:[%s342 + $0x18] sm:$0xf] %v710
        %727 = vst [vmem:[%s342 + $0x1c] sm:$0xf] %v711
        %v728 = vadd.f32 %v586, %v589
        %v729 = vadd.f32 %v728, %v594
        %v730 = vadd.f32 %v729, %v597
        %v731 = vadd.f32 %v730, %v602
        %v732 = vadd.f32 %v731, %v605
        %v733 = vadd.f32 %v732, %v610
        %v734 = vadd.f32 %v733, %v613
        %v735 = vadd.f32 %v734, %v618
        %v736 = vadd.f32 %v735, %v621
        %v737 = vadd.f32 %v736, %v626
        %v738 = vadd.f32 %v737, %v629
        %v739 = vadd.f32 %v738, %v634
        %v740 = vadd.f32 %v739, %v637
        %v741 = vadd.f32 %v740, %v642
        %v742 = vadd.f32 %v741, %v645
        %v743 = vrot.slane %v742, 4
        %v744 = vadd.f32 %v742, %v743
        %v745 = vrot.slane %v744, 2
        %v746 = vadd.f32 %v744, %v745
        %v747 = vrot.slane %v746, 1
        %v748 = vadd.f32 %v746, %v747
        %v749 = vmul.f32 %v748, 0.0078125
        %v750 = vsub.f32 %v586, %v749
        %v751 = vsub.f32 %v589, %v749
        %v752 = vsub.f32 %v594, %v749
        %v753 = vsub.f32 %v597, %v749
        %v754 = vsub.f32 %v602, %v749
        %v755 = vsub.f32 %v605, %v749
        %v756 = vsub.f32 %v610, %v749
        %v757 = vsub.f32 %v613, %v749
        %v758 = vsub.f32 %v618, %v749
        %v759 = vsub.f32 %v621, %v749
        %v760 = vsub.f32 %v626, %v749
        %v761 = vsub.f32 %v629, %v749
        %v762 = vsub.f32 %v634, %v749
        %v763 = vsub.f32 %v637, %v749
        %v764 = vsub.f32 %v642, %v749
        %v765 = vsub.f32 %v645, %v749
        %766 = vst [vmem:[%s348] sm:$0x1] %v749
        %v767 = vmul.f32 %v750, %v750
        %v768 = vmul.f32 %v751, %v751
        %v769 = vmul.f32 %v752, %v752
        %v770 = vmul.f32 %v753, %v753
        %v771 = vmul.f32 %v754, %v754
        %v772 = vmul.f32 %v755, %v755
        %v773 = vmul.f32 %v756, %v756
        %v774 = vmul.f32 %v757, %v757
        %v775 = vmul.f32 %v758, %v758
        %v776 = vmul.f32 %v759, %v759
        %v777 = vmul.f32 %v760, %v760
        %v778 = vmul.f32 %v761, %v761
        %v779 = vmul.f32 %v762, %v762
        %v780 = vmul.f32 %v763, %v763
        %v781 = vmul.f32 %v764, %v764
        %v782 = vmul.f32 %v765, %v765
        %v783 = vadd.f32 %v767, %v768
        %v784 = vadd.f32 %v783, %v769
        %v785 = vadd.f32 %v784, %v770
        %v786 = vadd.f32 %v785, %v771
        %v787 = vadd.f32 %v786, %v772
        %v788 = vadd.f32 %v787, %v773
        %v789 = vadd.f32 %v788, %v774
        %v790 = vadd.f32 %v789, %v775
        %v791 = vadd.f32 %v790, %v776
        %v792 = vadd.f32 %v791, %v777
        %v793 = vadd.f32 %v792, %v778
        %v794 = vadd.f32 %v793, %v779
        %v795 = vadd.f32 %v794, %v780
        %v796 = vadd.f32 %v795, %v781
        %v797 = vadd.f32 %v796, %v782
        %v798 = vrot.slane %v797, 4
        %v799 = vadd.f32 %v797, %v798
        %v800 = vrot.slane %v799, 2
        %v801 = vadd.f32 %v799, %v800
        %v802 = vrot.slane %v801, 1
        %v803 = vadd.f32 %v801, %v802
        %804 = vst [vmem:[%s354] sm:$0x1] %v803
        %s805 = sand.u32 %s134, 1
        %s806 = scalar_lea.sflag [#allocation4], %s805
        %s807 = sand.u32 %s134, 1
        %s808 = smul.addr %s807, 32
        %s809 = scalar_lea.vmem [#allocation7], %s808
        %s810 = sand.u32 %s31, 1
        %s811 = scalar_lea.sflag [#allocation9], %s810
        %s812 = sand.u32 %s164, 1
        %s813 = smul.addr %s812, 32
        %s814 = scalar_lea.vmem [#allocation8], %s813
        %s815 = sand.u32 %s31, 1
        %s816 = scalar_lea.sflag [#allocation9], %s815
        %s817 = sand.u32 %s194, 1
        %s818 = scalar_lea.vmem [#allocation10], %s817
        %s819 = sand.u32 %s224, 1
        %s820 = scalar_lea.sflag [#allocation12], %s819
        %s821 = sand.u32 %s224, 1
        %s822 = scalar_lea.vmem [#allocation11], %s821
        // Predicated region
        $region41: #{tpu_custom_call.1} parent=31 // pred_check
          %p823 = pneg %p144
        $region42: #{tpu_custom_call.1} parent=31 // pred_check_branch
          %825 = sbr.rel (%p823) target = $region44
        $region43: #{tpu_custom_call.1} parent=31 // pred_region
          %s826 = smul.u32 8, %s38
          %s828 = ssub.s32 512, 512
          %829 = vsyncadd %s806, %s828
          %s830 = smul.addr %s37, 8
          %s831 = sadd.s32 %s826, %s830
          %s832 = smul.addr %s36, 16
          %s833 = sadd.s32 %s831, %s832
          %s834 = smul.addr %s833, 64
          %s835 = scalar_lea.hbm %s3, %s834
          %s836 = sshll.u32 %s809, 4
          %s837 = int_to_ptr.vmem [resolvable:$true] %s836
          %842 = dma.vmem_to_hbm [thread:$0]  %s837, 512, %s835, %s806, 64, 64, 4
        $region44: #{tpu_custom_call.1} parent=31 // pred_fallthru
          _
        // Predicated region
        $region45: #{tpu_custom_call.1} parent=31 // pred_check
          %p843 = pneg %p174
        $region46: #{tpu_custom_call.1} parent=31 // pred_check_branch
          %845 = sbr.rel (%p843) target = $region48
        $region47: #{tpu_custom_call.1} parent=31 // pred_region
          %s846 = smul.u32 8, %s38
          %s848 = ssub.s32 512, 512
          %849 = vsyncadd %s811, %s848
          %s850 = smul.addr %s37, 8
          %s851 = sadd.s32 %s846, %s850
          %s852 = smul.addr %s36, 16
          %s853 = sadd.s32 %s851, %s852
          %s854 = smul.addr %s853, 64
          %s855 = scalar_lea.hbm %s4, %s854
          %s856 = sshll.u32 %s814, 4
          %s857 = int_to_ptr.vmem [resolvable:$true] %s856
          %862 = dma.vmem_to_hbm [thread:$0]  %s857, 512, %s855, %s811, 64, 64, 4
        $region48: #{tpu_custom_call.1} parent=31 // pred_fallthru
          _
        // Predicated region
        $region49: #{tpu_custom_call.1} parent=31 // pred_check
          %p863 = pneg %p204
        $region50: #{tpu_custom_call.1} parent=31 // pred_check_branch
          %865 = sbr.rel (%p863) target = $region52
        $region51: #{tpu_custom_call.1} parent=31 // pred_region
          %s867 = ssub.s32 16, 16
          %868 = vsyncadd %s816, %s867
          %s869 = sadd.s32 %s38, %s37
          %s870 = smul.addr %s36, 2
          %s871 = sadd.s32 %s869, %s870
          %s872 = smul.addr %s871, 16
          %s873 = scalar_lea.hbm %s5, %s872
          %s875 = sshll.u32 %s818, 4
          %s876 = int_to_ptr.vmem [resolvable:$true] %s875
          %878 = dma.vmem_to_hbm [thread:$0]  %s876, 16, %s873, %s816
        $region52: #{tpu_custom_call.1} parent=31 // pred_fallthru
          _
        // Predicated region
        $region53: #{tpu_custom_call.1} parent=31 // pred_check
          %p879 = pneg %p234
        $region54: #{tpu_custom_call.1} parent=31 // pred_check_branch
          %881 = sbr.rel (%p879) target = $region56
        $region55: #{tpu_custom_call.1} parent=31 // pred_region
          %s883 = ssub.s32 16, 16
          %884 = vsyncadd %s820, %s883
          %s885 = sadd.s32 %s38, %s37
          %s886 = smul.addr %s36, 2
          %s887 = sadd.s32 %s885, %s886
          %s888 = smul.addr %s887, 16
          %s889 = scalar_lea.hbm %s6, %s888
          %s891 = sshll.u32 %s822, 4
          %s892 = int_to_ptr.vmem [resolvable:$true] %s891
          %894 = dma.vmem_to_hbm [thread:$0]  %s892, 16, %s889, %s820
        $region56: #{tpu_custom_call.1} parent=31 // pred_fallthru
          _
      $region32: #{tpu_custom_call.1} parent=5 // pred_fallthru
        _
      %p895 = scmp.le.s32.totalorder 2, %s26
      // Predicated region
      $region57: #{tpu_custom_call.1} parent=5 // pred_check
        %p896 = pneg %p895
      $region58: #{tpu_custom_call.1} parent=5 // pred_check_branch
        %898 = sbr.rel (%p896) target = $region60
      $region59: #{tpu_custom_call.1} parent=5 // pred_region
        %s899 = ssub.s32 %s26, 2
        // Predicated region
        $region61: #{tpu_custom_call.1} parent=59 // pred_check
          %p900 = pneg %p150
        $region62: #{tpu_custom_call.1} parent=59 // pred_check_branch
          %902 = sbr.rel (%p900) target = $region64
        $region63: #{tpu_custom_call.1} parent=59 // pred_region
          %s903 = sand.u32 %s135, 1
          %s904 = scalar_lea.sflag [#allocation4], %s903
          %s905 = sand.u32 %s135, 1
          %s906 = smul.addr %s905, 32
          %s907 = scalar_lea.vmem [#allocation7], %s906
          %908 = dma.done %s904, 512
        $region64: #{tpu_custom_call.1} parent=59 // pred_fallthru
          _
        // Predicated region
        $region65: #{tpu_custom_call.1} parent=59 // pred_check
          %p909 = pneg %p180
        $region66: #{tpu_custom_call.1} parent=59 // pred_check_branch
          %911 = sbr.rel (%p909) target = $region68
        $region67: #{tpu_custom_call.1} parent=59 // pred_region
          %s912 = sand.u32 %s32, 1
          %s913 = scalar_lea.sflag [#allocation9], %s912
          %s914 = sand.u32 %s165, 1
          %s915 = smul.addr %s914, 32
          %s916 = scalar_lea.vmem [#allocation8], %s915
          %917 = dma.done %s913, 512
        $region68: #{tpu_custom_call.1} parent=59 // pred_fallthru
          _
        // Predicated region
        $region69: #{tpu_custom_call.1} parent=59 // pred_check
          %p918 = pneg %p210
        $region70: #{tpu_custom_call.1} parent=59 // pred_check_branch
          %920 = sbr.rel (%p918) target = $region72
        $region71: #{tpu_custom_call.1} parent=59 // pred_region
          %s921 = sand.u32 %s32, 1
          %s922 = scalar_lea.sflag [#allocation9], %s921
          %s923 = sand.u32 %s195, 1
          %s924 = scalar_lea.vmem [#allocation10], %s923
          %925 = dma.done %s922, 16
        $region72: #{tpu_custom_call.1} parent=59 // pred_fallthru
          _
        // Predicated region
        $region73: #{tpu_custom_call.1} parent=59 // pred_check
          %p926 = pneg %p240
        $region74: #{tpu_custom_call.1} parent=59 // pred_check_branch
          %928 = sbr.rel (%p926) target = $region76
        $region75: #{tpu_custom_call.1} parent=59 // pred_region
          %s929 = sand.u32 %s225, 1
          %s930 = scalar_lea.sflag [#allocation12], %s929
          %s931 = sand.u32 %s225, 1
          %s932 = scalar_lea.vmem [#allocation11], %s931
          %933 = dma.done %s930, 16
        $region76: #{tpu_custom_call.1} parent=59 // pred_fallthru
          _
      $region60: #{tpu_custom_call.1} parent=5 // pred_fallthru
        _
    $region6: #{tpu_custom_call.1} parent=1 // loop_footer
      %s30 = sadd.s32 1, %s26
    $region7: #{tpu_custom_call.1} parent=1 // loop_footer_branch
      %25 = sbr.rel target = $region3
    $region8: #{tpu_custom_call.1} parent=1 // loop_exit
      _
    %934 = vsyncpa [#allocation3], 1
    %s935 = scalar_lea.sflag [#allocation3], 1
    %936 = vsyncpa %s935, 1
    %937 = vsyncpa [#allocation6], 1
    %938 = vsyncpa [#allocation4], 1
    %s939 = scalar_lea.sflag [#allocation4], 1
    %940 = vsyncpa %s939, 1
    %941 = vsyncpa [#allocation9], 1
    %s942 = scalar_lea.sflag [#allocation9], 1
    %943 = vsyncpa %s942, 1
    %944 = vsyncpa [#allocation12], 1
    %s945 = scalar_lea.sflag [#allocation12], 1
    %946 = vsyncpa %s945, 1

</llo_original>
